<compile_context>
chip_gen: v6e
topology: v6e:2x2x1
jax: 0.10.0
libtpu: 0.0.40
codegen_flags: <defaults>
</compile_context>

<pallas_src>
import functools

import numpy as np
import jax
import jax.numpy as jnp
from jax.experimental import pallas as pl
from jax.experimental.pallas import tpu as pltpu

HIDDEN = 64          # per-head hidden width (fixed by the PyTorch module)
H2 = 2 * HIDDEN      # fused hidden width = 128 (one full lane dimension)
OUT_LANES = 128      # lane-padded fused output width


def _round_up(x, m):
    return ((x + m - 1) // m) * m


def actor_critic_kernel(state_ref, params_ref, out_ref, *, sd_pad):
    """One batch tile: z[:, 0:A] = pi logits, z[:, A] = value, rest = pad."""
    s = state_ref[...]                                    # [TB, sd_pad]

    # Static, sublane-aligned slices into the packed parameter slab.
    w1 = params_ref[pl.ds(0, sd_pad), :]                  # [sd_pad, 128]
    w2 = params_ref[pl.ds(sd_pad, H2), :]                 # [128, 128] block-diag
    w3 = params_ref[pl.ds(sd_pad + H2, H2), :]            # [128, 128] head weights
    bias = params_ref[pl.ds(sd_pad + 2 * H2, 8), :]       # [8, 128] bias block
    b1 = bias[0:1, :]
    b2 = bias[1:2, :]
    b3 = bias[2:3, :]

    # Fused stacked MLP: lanes 0..63 = actor path, lanes 64..127 = critic path.
    h = jnp.tanh(jnp.dot(s, w1, preferred_element_type=jnp.float32) + b1)
    h = jnp.tanh(jnp.dot(h, w2, preferred_element_type=jnp.float32) + b2)
    out_ref[...] = jnp.dot(h, w3, preferred_element_type=jnp.float32) + b3


def pack_params(p, state_dim, action_dim):
    """Pack the 12 actor/critic tensors into one [sd_pad + 264, 128] f32 slab."""
    assert action_dim + 1 <= OUT_LANES
    sd_pad = _round_up(state_dim, 8)

    w1 = jnp.zeros((sd_pad, H2), jnp.float32)
    w1 = w1.at[:state_dim, :HIDDEN].set(p["w1"]).at[:state_dim, HIDDEN:].set(p["w1v"])

    w2 = jnp.zeros((H2, H2), jnp.float32)
    w2 = w2.at[:HIDDEN, :HIDDEN].set(p["w2"]).at[HIDDEN:, HIDDEN:].set(p["w2v"])

    w3 = jnp.zeros((H2, OUT_LANES), jnp.float32)
    w3 = w3.at[:HIDDEN, :action_dim].set(p["wpi"])
    w3 = w3.at[HIDDEN:, action_dim:action_dim + 1].set(p["wv"])

    bias = jnp.zeros((8, OUT_LANES), jnp.float32)     # 8 rows -> sublane aligned
    bias = bias.at[0, :HIDDEN].set(p["b1"][0]).at[0, HIDDEN:].set(p["b1v"][0])
    bias = bias.at[1, :HIDDEN].set(p["b2"][0]).at[1, HIDDEN:].set(p["b2v"][0])
    bias = bias.at[2, :action_dim].set(p["bpi"][0])
    bias = bias.at[2, action_dim].set(p["bv"][0, 0])

    return jnp.concatenate([w1, w2, w3, bias], axis=0)


def actor_critic_forward(state, packed_params, action_dim, *, block_b=512):
    """pi(state) and v(state) in one batch-tiled Pallas call.

    state:         [B, state_dim] float32 (batch many env steps for throughput)
    packed_params: [sd_pad + 264, 128] float32 (from pack_params)
    returns: (prob [B, action_dim], value [B, 1])
    """
    B, state_dim = state.shape
    sd_pad = _round_up(state_dim, 8)
    block_b = max(8, min(_round_up(block_b, 8), _round_up(B, 8)))
    nt = pl.cdiv(B, block_b)
    b_pad = nt * block_b

    # Zero-padded, (8,128)-aligned state slab (layout plumbing, not compute).
    s = jnp.zeros((b_pad, sd_pad), jnp.float32).at[:B, :state_dim].set(state)

    p_rows = packed_params.shape[0]
    flops = 2 * b_pad * (sd_pad * H2 + H2 * H2 + H2 * OUT_LANES) + 3 * b_pad * OUT_LANES
    transcendentals = 2 * b_pad * H2                      # two tanh layers
    bytes_accessed = 4 * (b_pad * sd_pad + packed_params.size + b_pad * OUT_LANES)

    out = pl.pallas_call(
        functools.partial(actor_critic_kernel, sd_pad=sd_pad),
        out_shape=jax.ShapeDtypeStruct((b_pad, OUT_LANES), jnp.float32),
        grid=(nt,),
        in_specs=[
            # Batch tiles of the state.
            pl.BlockSpec((block_b, sd_pad), lambda i: (i, 0)),
            # Constant index_map: param slab DMA'd once, VMEM-resident across grid.
            pl.BlockSpec((p_rows, OUT_LANES), lambda i: (0, 0)),
        ],
        out_specs=pl.BlockSpec((block_b, OUT_LANES), lambda i: (i, 0)),
        compiler_params=pltpu.CompilerParams(
            dimension_semantics=("parallel",),            # megacore sharding on v7x
        ),
        cost_estimate=pl.CostEstimate(
            flops=flops,
            transcendentals=transcendentals,
            bytes_accessed=bytes_accessed,
        ),
    )(s, packed_params)

    logits = out[:B, :action_dim]
    value = out[:B, action_dim:action_dim + 1]
    # torch.softmax(x, dim=0): normalization over the *batch* axis couples every
    # row, so with batch tiling it must run after all tiles.  Done here on the
    # tiny [B, action_dim] slice; also excludes the zero-padded rows.
    prob = jax.nn.softmax(logits, axis=0)
    return prob, value


def init_params(key, state_dim, action_dim, hidden=HIDDEN):
    """Deterministic init mimicking nn.Linear default U(-1/sqrt(in), 1/sqrt(in)).

    Weights stored as [in, out] (already transposed for x @ W)."""
    def linear(k, fan_in, fan_out):
        kw, kb = jax.random.split(k)
        bound = 1.0 / np.sqrt(fan_in)
        w = jax.random.uniform(kw, (fan_in, fan_out), jnp.float32, -bound, bound)
        b = jax.random.uniform(kb, (1, fan_out), jnp.float32, -bound, bound)
        return w, b

    ks = jax.random.split(key, 6)
    w1, b1 = linear(ks[0], state_dim, hidden)     # fc1
    w2, b2 = linear(ks[1], hidden, hidden)        # fc2
    w1v, b1v = linear(ks[2], state_dim, hidden)   # fc1v
    w2v, b2v = linear(ks[3], hidden, hidden)      # fc2v
    wpi, bpi = linear(ks[4], hidden, action_dim)  # fc_pi
    wv, bv = linear(ks[5], hidden, 1)             # fc_v
    return dict(
        w1=w1, b1=b1, w2=w2, b2=b2, wpi=wpi, bpi=bpi,
        w1v=w1v, b1v=b1v, w2v=w2v, b2v=b2v, wv=wv, bv=bv,
    )


def reference_forward(state, p):
    """Pure-JAX reference mirroring the PyTorch module (unfused)."""
    h = jnp.tanh(state @ p["w1"] + p["b1"])
    h = jnp.tanh(h @ p["w2"] + p["b2"])
    logits = h @ p["wpi"] + p["bpi"]
    prob = jax.nn.softmax(logits, axis=0)  # dim=0, as in the PyTorch code
    hv = jnp.tanh(state @ p["w1v"] + p["b1v"])
    hv = jnp.tanh(hv @ p["w2v"] + p["b2v"])
    value = hv @ p["wv"] + p["bv"]
    return prob, value


# TODO(synk): act()/evaluate() use torch.distributions.Categorical (sampling,
# log_prob, entropy); that host-side RL glue is intentionally not part of this
# forward-pass kernel.


if __name__ == "__main__":
    key = jax.random.PRNGKey(0)
    k_state, k_params = jax.random.split(key)

    # Small demo shapes; block_b=8 deliberately forces a multi-tile grid (and a
    # padded batch) so the batch-tiled path and the cross-tile softmax handling
    # are exercised.  Production use: batch a whole rollout (B >> 512) with the
    # default block_b=512.
    B, state_dim, action_dim = 20, 9, 4
    state = jax.random.normal(k_state, (B, state_dim), jnp.float32)
    params = init_params(k_params, state_dim, action_dim)

    # Pack once (amortized across environment steps in a real RL loop).
    packed = pack_params(params, state_dim, action_dim)

    prob, value = actor_critic_forward(state, packed, action_dim, block_b=8)
    prob = jax.block_until_ready(prob)
    value = jax.block_until_ready(value)

    ref_prob, ref_value = reference_forward(state, params)
    assert prob.shape == (B, action_dim) and value.shape == (B, 1)
    assert np.allclose(np.asarray(prob), np.asarray(ref_prob), atol=1e-5, rtol=1e-5)
    assert np.allclose(np.asarray(value), np.asarray(ref_value), atol=1e-5, rtol=1e-5)

    print("KERNEL_OK")
</pallas_src>

<mosaic_0001>
module attributes {stable_mosaic.version = 11 : i64} {
  func.func @actor_critic_kernel(%arg0: i32, %arg1: memref<8x16xf32, #tpu.memory_space<vmem>>, %arg2: memref<280x128xf32, #tpu.memory_space<vmem>>, %arg3: memref<8x128xf32, #tpu.memory_space<vmem>>) attributes {dimension_semantics = [#tpu.dimension_semantics<parallel>], iteration_bounds = array<i64: 3>, scalar_prefetch = 0 : i64, scratch_operands = 0 : i64, tpu.core_type = #tpu.core_type<tc>, window_params = [{transform_indices = @transform_0, window_bounds = array<i64: 8, 16>}, {pipeline_mode = #tpu.pipeline_mode<synchronous>, transform_indices = @transform_1, window_bounds = array<i64: 280, 128>}, {transform_indices = @transform_2, window_bounds = array<i64: 8, 128>}]} {
    %c0 = arith.constant 0 : index
    %c0_0 = arith.constant 0 : index
    %0 = vector.load %arg1[%c0, %c0_0] : memref<8x16xf32, #tpu.memory_space<vmem>>, vector<8x16xf32>
    %c0_1 = arith.constant 0 : index
    %c0_2 = arith.constant 0 : index
    %1 = vector.load %arg2[%c0_1, %c0_2] : memref<280x128xf32, #tpu.memory_space<vmem>>, vector<16x128xf32>
    %c16 = arith.constant 16 : index
    %c0_3 = arith.constant 0 : index
    %2 = vector.load %arg2[%c16, %c0_3] : memref<280x128xf32, #tpu.memory_space<vmem>>, vector<128x128xf32>
    %c144 = arith.constant 144 : index
    %c0_4 = arith.constant 0 : index
    %3 = vector.load %arg2[%c144, %c0_4] : memref<280x128xf32, #tpu.memory_space<vmem>>, vector<128x128xf32>
    %c272 = arith.constant 272 : index
    %c0_5 = arith.constant 0 : index
    %4 = vector.load %arg2[%c272, %c0_5] : memref<280x128xf32, #tpu.memory_space<vmem>>, vector<8x128xf32>
    %5 = vector.extract_strided_slice %4 {offsets = [0, 0], sizes = [1, 128], strides = [1, 1]} : vector<8x128xf32> to vector<1x128xf32>
    %6 = vector.extract_strided_slice %4 {offsets = [1, 0], sizes = [1, 128], strides = [1, 1]} : vector<8x128xf32> to vector<1x128xf32>
    %7 = vector.extract_strided_slice %4 {offsets = [2, 0], sizes = [1, 128], strides = [1, 1]} : vector<8x128xf32> to vector<1x128xf32>
    %cst = arith.constant dense<0.000000e+00> : vector<8x128xf32>
    %8 = tpu.matmul %0, %1, %cst {dimension_numbers = #tpu.dot_dimension_numbers<[1], [0], [0], [1], [0, 0, 1, 1], [], []>} : vector<8x16xf32>, vector<16x128xf32>, vector<8x128xf32> -> vector<8x128xf32>
    %9 = vector.broadcast %5 : vector<1x128xf32> to vector<8x128xf32>
    %10 = arith.addf %8, %9 : vector<8x128xf32>
    %11 = math.tanh %10 : vector<8x128xf32>
    %cst_6 = arith.constant dense<0.000000e+00> : vector<8x128xf32>
    %12 = tpu.matmul %11, %2, %cst_6 {dimension_numbers = #tpu.dot_dimension_numbers<[1], [0], [0], [1], [0, 0, 1, 1], [], []>} : vector<8x128xf32>, vector<128x128xf32>, vector<8x128xf32> -> vector<8x128xf32>
    %13 = vector.broadcast %6 : vector<1x128xf32> to vector<8x128xf32>
    %14 = arith.addf %12, %13 : vector<8x128xf32>
    %15 = math.tanh %14 : vector<8x128xf32>
    %cst_7 = arith.constant dense<0.000000e+00> : vector<8x128xf32>
    %16 = tpu.matmul %15, %3, %cst_7 {dimension_numbers = #tpu.dot_dimension_numbers<[1], [0], [0], [1], [0, 0, 1, 1], [], []>} : vector<8x128xf32>, vector<128x128xf32>, vector<8x128xf32> -> vector<8x128xf32>
    %17 = vector.broadcast %7 : vector<1x128xf32> to vector<8x128xf32>
    %18 = arith.addf %16, %17 : vector<8x128xf32>
    %c0_8 = arith.constant 0 : index
    %c0_9 = arith.constant 0 : index
    %19 = vector.load %arg3[%c0_8, %c0_9] : memref<8x128xf32, #tpu.memory_space<vmem>>, vector<8x128xf32>
    tpu.vector_store %arg3[%c0_8, %c0_9], %18 {strides = array<i32>} : memref<8x128xf32, #tpu.memory_space<vmem>>, vector<8x128xf32>,
    return
  }
  func.func @transform_0(%arg0: i32) -> (i32, i32) {
    %c0_i32 = arith.constant 0 : i32
    %c0_i32_0 = arith.constant 0 : i32
    return %arg0, %c0_i32 : i32, i32
  }
  func.func @transform_1(%arg0: i32) -> (i32, i32) {
    %c0_i32 = arith.constant 0 : i32
    %c0_i32_0 = arith.constant 0 : i32
    %c0_i32_1 = arith.constant 0 : i32
    return %c0_i32, %c0_i32_0 : i32, i32
  }
  func.func @transform_2(%arg0: i32) -> (i32, i32) {
    %c0_i32 = arith.constant 0 : i32
    %c0_i32_0 = arith.constant 0 : i32
    return %arg0, %c0_i32 : i32, i32
  }
}

</mosaic_0001>

<llo_original>
// kernel: tpu_custom_call.1
$region0: #{tpu_custom_call.1}
  #allocation0 [shape = 'u32[]', space=smem, size = 0x4, offset = 0x4, fixed_abs, tag = 'smem constant byte address 0x4 - core index']
  #allocation1 [shape = 'u32[144,128]{1,0:T(1,128)}', space=vmem, size = 0x12000, scoped, tag = 'internal scratch']
  %s0 = inlined_call_operand.vmem [shape: f32[24,16], index: 0, kind: input, shape index: {}]
  %s1 = inlined_call_operand.hbm [shape: f32[280,128], index: 1, kind: input, shape index: {}]
  %s2 = inlined_call_operand.hbm [shape: f32[24,128], index: 2, kind: output, shape index: {}]
  %s3 = sld [smem:[#allocation0]]
  $region45: #{tpu_custom_call.1} parent=0
    _
  %s5 = ssub.s32 1, %s3
  %s6 = scalar_select 0, %s5, %s3
  $region1: #{tpu_custom_call.1} parent=0
    #allocation2 [shape = 'u8[143360]{0}', space=vmem, size = 0x23000, scoped, tag = 'input window, operand 1, single buffered']
    #allocation3 [shape = 's32[2]{0}', space=sflag, size = 0x8, scoped, tag = 'scoped memory for tpu_custom_call.1']
    #allocation4 [shape = 's32[2]{0}', space=sflag, size = 0x8, scoped, tag = 'scoped memory for tpu_custom_call.1']
    #allocation5 [shape = 'u8[8192]{0}', space=vmem, size = 0x2000, scoped, tag = 'output window, operand 0']
    %7 = vsyncpa [#allocation3], 0
    %8 = vsyncpa [#allocation4], 0
    %s9 = scalar_lea.sflag [#allocation4], 1
    %10 = vsyncpa %s9, 0
    loop: start=0, step=1, limit=5
    $region2: #{tpu_custom_call.1} parent=1 // loop_pre_header
      _
    $region3: #{tpu_custom_call.1} parent=1 // loop_header
      %s12 = sphi 0, %s16
      %p13 = scmp.ge.s32.totalorder %s12, 5
      %s22 = sphi 0, %s24
      %s25 = sphi 0, %s22
      %s26 = sphi 0, %s25
      %s42 = sphi 0, %s26
      %s46 = sphi 0, %s46
      %s48 = sphi 0, %s46
      %s49 = sphi 0, %s48
      %s63 = sphi 0, %s49
      %s69 = sphi 0, %s71
      %s72 = sphi 0, %s69
      %s73 = sphi 0, %s72
      %s89 = sphi 0, %s73
    $region4: #{tpu_custom_call.1} parent=1 // loop_header_branch
      %15 = sbr.rel (%p13) target = $region8
    $region5: #{tpu_custom_call.1} parent=1 // loop_body
      %s17 = ssub.s32 %s12, 1
      %s18 = ssub.s32 %s12, 2
      %s19 = sadd.s32 %s12, 1
      %s20 = ssub.s32 %s12, %s19
      %p21 = scmp.eq.s32.totalorder %s20, 0
      %s23 = sadd.s32 %s22, 1
      %s24 = scalar_select %p21, %s22, %s23
      %p27 = pneg %p21
      %p28 = scmp.eq.s32.totalorder %s12, 2
      %p29 = por %p27, %p28
      %p30 = scmp.ne.s32.totalorder %s22, %s25
      %p31 = scmp.eq.s32.totalorder %s12, 0
      %p32 = por %p30, %p31
      %p33 = scmp.ne.s32.totalorder %s22, %s25
      %p34 = scmp.eq.s32.totalorder %s17, 2
      %p35 = por %p33, %p34
      %p36 = scmp.ne.s32.totalorder %s25, %s26
      %p37 = scmp.eq.s32.totalorder %s17, 0
      %p38 = por %p36, %p37
      %p39 = scmp.ne.s32.totalorder %s25, %s26
      %p40 = scmp.eq.s32.totalorder %s18, 2
      %p41 = por %p39, %p40
      %p43 = scmp.ne.s32.totalorder %s26, %s42
      %p44 = scmp.eq.s32.totalorder %s18, 0
      %p45 = por %p43, %p44
      %s47 = sadd.s32 %s46, 1
      %p50 = scmp.eq.s32.totalorder %s12, 2
      %p51 = scmp.ne.s32.totalorder %s46, %s48
      %p52 = scmp.eq.s32.totalorder %s12, 0
      %p53 = por %p51, %p52
      %p54 = scmp.ne.s32.totalorder %s46, %s48
      %p55 = scmp.eq.s32.totalorder %s17, 2
      %p56 = por %p54, %p55
      %p57 = scmp.ne.s32.totalorder %s48, %s49
      %p58 = scmp.eq.s32.totalorder %s17, 0
      %p59 = por %p57, %p58
      %p60 = scmp.ne.s32.totalorder %s48, %s49
      %p61 = scmp.eq.s32.totalorder %s18, 2
      %p62 = por %p60, %p61
      %p64 = scmp.ne.s32.totalorder %s49, %s63
      %p65 = scmp.eq.s32.totalorder %s18, 0
      %p66 = por %p64, %p65
      %s67 = ssub.s32 %s12, %s19
      %p68 = scmp.eq.s32.totalorder %s67, 0
      %s70 = sadd.s32 %s69, 1
      %s71 = scalar_select %p68, %s69, %s70
      %p74 = pneg %p68
      %p75 = scmp.eq.s32.totalorder %s12, 2
      %p76 = por %p74, %p75
      %p77 = scmp.ne.s32.totalorder %s69, %s72
      %p78 = scmp.eq.s32.totalorder %s12, 0
      %p79 = por %p77, %p78
      %p80 = scmp.ne.s32.totalorder %s69, %s72
      %p81 = scmp.eq.s32.totalorder %s17, 2
      %p82 = por %p80, %p81
      %p83 = scmp.ne.s32.totalorder %s72, %s73
      %p84 = scmp.eq.s32.totalorder %s17, 0
      %p85 = por %p83, %p84
      %p86 = scmp.ne.s32.totalorder %s72, %s73
      %p87 = scmp.eq.s32.totalorder %s18, 2
      %p88 = por %p86, %p87
      %p90 = scmp.ne.s32.totalorder %s73, %s89
      %p91 = scmp.eq.s32.totalorder %s18, 0
      %p92 = por %p90, %p91
      %p93 = scmp.le.s32.totalorder 1, %s12
      %p94 = scmp.lt.s32.totalorder %s12, 4
      %p95 = pnand %p93, %p94
      %p96 = pneg %p95
      // Predicated region
      $region9: #{tpu_custom_call.1} parent=5 // pred_check
        _
      $region10: #{tpu_custom_call.1} parent=5 // pred_check_branch
        %98 = sbr.rel (%p95) target = $region12
      $region11: #{tpu_custom_call.1} parent=5 // pred_region
        %s99 = ssub.s32 %s12, 1
        // Predicated region
        $region13: #{tpu_custom_call.1} parent=11 // pred_check
          %p100 = pneg %p59
        $region14: #{tpu_custom_call.1} parent=11 // pred_check_branch
          %102 = sbr.rel (%p100) target = $region16
        $region15: #{tpu_custom_call.1} parent=11 // pred_region
          %s104 = ssub.s32 4480, 4480
          %105 = vsyncadd [#allocation3], %s104
          %s106 = sshll.u32 [#allocation2], 4
          %s107 = int_to_ptr.vmem [resolvable:$true] %s106
          %112 = dma.hbm_to_vmem [thread:$0]  %s1, 4480, %s107, [#allocation3], 128, 128, 8
        $region16: #{tpu_custom_call.1} parent=11 // pred_fallthru
          _
      $region12: #{tpu_custom_call.1} parent=5 // pred_fallthru
        _
      %p113 = scmp.lt.s32.totalorder %s12, 3
      // Predicated region
      $region17: #{tpu_custom_call.1} parent=5 // pred_check
        %p114 = pneg %p113
      $region18: #{tpu_custom_call.1} parent=5 // pred_check_branch
        %116 = sbr.rel (%p114) target = $region20
      $region19: #{tpu_custom_call.1} parent=5 // pred_region
        // Predicated region
        $region21: #{tpu_custom_call.1} parent=19 // pred_check
          %p117 = pneg %p32
        $region22: #{tpu_custom_call.1} parent=19 // pred_check_branch
          %119 = sbr.rel (%p117) target = $region24
        $region23: #{tpu_custom_call.1} parent=19 // pred_region
          %p120 = scmp.lt.s32.totalorder %s12, 2
          %s121 = scalar_select %p120, %s12, 2
          %s122 = smul.addr %s121, 8
          %s123 = scalar_lea.vmem %s0, %s122
        $region24: #{tpu_custom_call.1} parent=19 // pred_fallthru
          _
      $region20: #{tpu_custom_call.1} parent=5 // pred_fallthru
        _
      %p124 = scmp.le.s32.totalorder 1, %s12
      %p125 = scmp.lt.s32.totalorder %s12, 4
      %p126 = pnand %p124, %p125
      %p127 = pneg %p126
      // Predicated region
      $region25: #{tpu_custom_call.1} parent=5 // pred_check
        _
      $region26: #{tpu_custom_call.1} parent=5 // pred_check_branch
        %129 = sbr.rel (%p126) target = $region28
      $region27: #{tpu_custom_call.1} parent=5 // pred_region
        %s130 = ssub.s32 %s12, 1
        // Predicated region
        $region29: #{tpu_custom_call.1} parent=27 // pred_check
          %p131 = pneg %p59
        $region30: #{tpu_custom_call.1} parent=27 // pred_check_branch
          %133 = sbr.rel (%p131) target = $region32
        $region31: #{tpu_custom_call.1} parent=27 // pred_region
          %134 = dma.done [#allocation3], 4480
        $region32: #{tpu_custom_call.1} parent=27 // pred_fallthru
          _
        %p135 = scmp.lt.s32.totalorder %s17, 2
        %s136 = scalar_select %p135, %s17, 2
        %s137 = smul.addr %s136, 8
        %s138 = scalar_lea.vmem %s0, %s137
        %p139 = pneg %p38
        %p140 = pneg %p35
        %p141 = pneg %p59
        %p142 = pneg %p56
        %p143 = pneg %p85
        %p144 = pneg %p82
        %s145 = sand.u32 %s72, 1
        %s146 = scalar_lea.sflag [#allocation4], %s145
        %s147 = sand.u32 %s72, 1
        %s148 = smul.addr %s147, 8
        %s149 = scalar_lea.vmem [#allocation5], %s148
        %p150 = scmp.lt.s32.totalorder %s17, 2
        %s151 = scalar_select %p150, %s17, 2
        %s152 = smul.addr %s151, 8
        %s153 = scalar_lea.vmem %s0, %s152
        %v154 = vld [vmem:[%s153] sm:$0xff]
        %v155 = vld [vmem:[#allocation2] sm:$0xff]
        %v156 = vld [vmem:[#allocation2 + $0x8] sm:$0xff]
        %v157 = vld [vmem:[#allocation2 + $0x10] sm:$0xff]
        %v158 = vld [vmem:[#allocation2 + $0x18] sm:$0xff]
        %v159 = vld [vmem:[#allocation2 + $0x20] sm:$0xff]
        %v160 = vld [vmem:[#allocation2 + $0x28] sm:$0xff]
        %v161 = vld [vmem:[#allocation2 + $0x30] sm:$0xff]
        %v162 = vld [vmem:[#allocation2 + $0x38] sm:$0xff]
        %v163 = vld [vmem:[#allocation2 + $0x40] sm:$0xff]
        %v164 = vld [vmem:[#allocation2 + $0x48] sm:$0xff]
        %v165 = vld [vmem:[#allocation2 + $0x50] sm:$0xff]
        %v166 = vld [vmem:[#allocation2 + $0x58] sm:$0xff]
        %v167 = vld [vmem:[#allocation2 + $0x60] sm:$0xff]
        %v168 = vld [vmem:[#allocation2 + $0x68] sm:$0xff]
        %v169 = vld [vmem:[#allocation2 + $0x70] sm:$0xff]
        %v170 = vld [vmem:[#allocation2 + $0x78] sm:$0xff]
        %v171 = vld [vmem:[#allocation2 + $0x80] sm:$0xff]
        %v172 = vld [vmem:[#allocation2 + $0x88] sm:$0xff]
        %v173 = vld [vmem:[#allocation2 + $0x90] sm:$0xff]
        %v174 = vld [vmem:[#allocation2 + $0x98] sm:$0xff]
        %v175 = vld [vmem:[#allocation2 + $0xa0] sm:$0xff]
        %v176 = vld [vmem:[#allocation2 + $0xa8] sm:$0xff]
        %v177 = vld [vmem:[#allocation2 + $0xb0] sm:$0xff]
        %v178 = vld [vmem:[#allocation2 + $0xb8] sm:$0xff]
        %v179 = vld [vmem:[#allocation2 + $0xc0] sm:$0xff]
        %v180 = vld [vmem:[#allocation2 + $0xc8] sm:$0xff]
        %v181 = vld [vmem:[#allocation2 + $0xd0] sm:$0xff]
        %v182 = vld [vmem:[#allocation2 + $0xd8] sm:$0xff]
        %v183 = vld [vmem:[#allocation2 + $0xe0] sm:$0xff]
        %v184 = vld [vmem:[#allocation2 + $0xe8] sm:$0xff]
        %v185 = vld [vmem:[#allocation2 + $0xf0] sm:$0xff]
        %v186 = vld [vmem:[#allocation2 + $0xf8] sm:$0xff]
        %v187 = vld [vmem:[#allocation2 + $0x100] sm:$0xff]
        %v188 = vld [vmem:[#allocation2 + $0x108] sm:$0xff]
        %v189 = vld [vmem:[#allocation2 + $0x110] sm:$0xff]
        %v190 = vlaneseq
        %v191 = vshrl.u32 %v190, 7
        %v192 = vsub.s32 0, %v191
        %v193 = vrot.slane %v189, %v192
        %vm194 = vcmask 130048
        %v196 = vsel %vm194, %v154, 0
        %198 = vmatprep.subr.mxu0 0.0
        %199 = vmatpush1.msra.mxu0 0.0
        %200 = vmatprep.subr.mxu0 0.0
        %201 = vmatpush1.msra.mxu0 0.0
        %202 = vmatprep.subr.mxu0 0.0
        %203 = vmatpush1.msra.mxu0 0.0
        %204 = vmatprep.subr.mxu0 0.0
        %205 = vmatpush1.msra.mxu0 0.0
        %206 = vmatprep.subr.mxu0 0.0
        %207 = vmatpush1.msra.mxu0 0.0
        %208 = vmatprep.subr.mxu0 0.0
        %209 = vmatpush1.msra.mxu0 0.0
        %210 = vmatprep.subr.mxu0 0.0
        %211 = vmatpush1.msra.mxu0 0.0
        %212 = vmatprep.subr.mxu0 0.0
        %213 = vmatpush1.msra.mxu0 0.0
        %214 = vmatprep.subr.mxu0 0.0
        %215 = vmatpush1.msra.mxu0 0.0
        %216 = vmatprep.subr.mxu0 0.0
        %217 = vmatpush1.msra.mxu0 0.0
        %218 = vmatprep.subr.mxu0 0.0
        %219 = vmatpush1.msra.mxu0 0.0
        %220 = vmatprep.subr.mxu0 0.0
        %221 = vmatpush1.msra.mxu0 0.0
        %222 = vmatprep.subr.mxu0 0.0
        %223 = vmatpush1.msra.mxu0 0.0
        %224 = vmatprep.subr.mxu0 0.0
        %225 = vmatpush1.msra.mxu0 0.0
        %226 = vmatprep.subr.mxu0 0.0
        %227 = vmatpush1.msra.mxu0 %v156
        %228 = vmatprep.subr.mxu0 0.0
        %229 = vmatpush1.msra.mxu0 %v155
        %230 = vmatprep.subr.mxu0 0.0
        %231 = vmatpush2.msra.mxu0 0.0
        %232 = vmatprep.subr.mxu0 0.0
        %233 = vmatpush2.msra.mxu0 0.0
        %234 = vmatprep.subr.mxu0 0.0
        %235 = vmatpush2.msra.mxu0 0.0
        %236 = vmatprep.subr.mxu0 0.0
        %237 = vmatpush2.msra.mxu0 0.0
        %238 = vmatprep.subr.mxu0 0.0
        %239 = vmatpush2.msra.mxu0 0.0
        %240 = vmatprep.subr.mxu0 0.0
        %241 = vmatpush2.msra.mxu0 0.0
        %242 = vmatprep.subr.mxu0 0.0
        %243 = vmatpush2.msra.mxu0 0.0
        %244 = vmatprep.subr.mxu0 0.0
        %245 = vmatpush2.msra.mxu0 0.0
        %246 = vmatprep.subr.mxu0 0.0
        %247 = vmatpush2.msra.mxu0 0.0
        %248 = vmatprep.subr.mxu0 0.0
        %249 = vmatpush2.msra.mxu0 0.0
        %250 = vmatprep.subr.mxu0 0.0
        %251 = vmatpush2.msra.mxu0 0.0
        %252 = vmatprep.subr.mxu0 0.0
        %253 = vmatpush2.msra.mxu0 0.0
        %254 = vmatprep.subr.mxu0 0.0
        %255 = vmatpush2.msra.mxu0 0.0
        %256 = vmatprep.subr.mxu0 0.0
        %257 = vmatpush2.msra.mxu0 0.0
        %258 = vmatprep.subr.mxu0 0.0
        %259 = vmatpush2.msra.mxu0 0.0
        %260 = vmatprep.subr.mxu0 0.0
        %261 = vmatpush2.msra.mxu0 0.0
        %262 = vmatprep.mubr.f32.mxu0 0.0
        %263 = vmatmul.mubr.f32.gmra.mxu0 %v196
        %v264 = vpop.f32.mrf.mxu0
        %v265 = vadd.f32 %v193, %v264
        %v266 = vpop.f32.mrf.mxu0
        %267 = vdwg.mxu0
        %v268 = vtanh.pop %v265
        %v269 = vlaneseq
        %v270 = vshrl.u32 %v269, 7
        %v271 = vsub.s32 1, %v270
        %v272 = vrot.slane %v189, %v271
        %273 = vmatprep.subr.mxu0 0.0
        %274 = vmatpush1.msra.mxu0 %v172
        %275 = vmatprep.subr.mxu0 0.0
        %276 = vmatpush1.msra.mxu0 %v171
        %277 = vmatprep.subr.mxu0 0.0
        %278 = vmatpush1.msra.mxu0 %v170
        %279 = vmatprep.subr.mxu0 0.0
        %280 = vmatpush1.msra.mxu0 %v169
        %281 = vmatprep.subr.mxu0 0.0
        %282 = vmatpush1.msra.mxu0 %v168
        %283 = vmatprep.subr.mxu0 0.0
        %284 = vmatpush1.msra.mxu0 %v167
        %285 = vmatprep.subr.mxu0 0.0
        %286 = vmatpush1.msra.mxu0 %v166
        %287 = vmatprep.subr.mxu0 0.0
        %288 = vmatpush1.msra.mxu0 %v165
        %289 = vmatprep.subr.mxu0 0.0
        %290 = vmatpush1.msra.mxu0 %v164
        %291 = vmatprep.subr.mxu0 0.0
        %292 = vmatpush1.msra.mxu0 %v163
        %293 = vmatprep.subr.mxu0 0.0
        %294 = vmatpush1.msra.mxu0 %v162
        %295 = vmatprep.subr.mxu0 0.0
        %296 = vmatpush1.msra.mxu0 %v161
        %297 = vmatprep.subr.mxu0 0.0
        %298 = vmatpush1.msra.mxu0 %v160
        %299 = vmatprep.subr.mxu0 0.0
        %300 = vmatpush1.msra.mxu0 %v159
        %301 = vmatprep.subr.mxu0 0.0
        %302 = vmatpush1.msra.mxu0 %v158
        %303 = vmatprep.subr.mxu0 0.0
        %304 = vmatpush1.msra.mxu0 %v157
        %305 = vmatprep.subr.mxu0 0.0
        %306 = vmatpush2.msra.mxu0 0.0
        %307 = vmatprep.subr.mxu0 0.0
        %308 = vmatpush2.msra.mxu0 0.0
        %309 = vmatprep.subr.mxu0 0.0
        %310 = vmatpush2.msra.mxu0 0.0
        %311 = vmatprep.subr.mxu0 0.0
        %312 = vmatpush2.msra.mxu0 0.0
        %313 = vmatprep.subr.mxu0 0.0
        %314 = vmatpush2.msra.mxu0 0.0
        %315 = vmatprep.subr.mxu0 0.0
        %316 = vmatpush2.msra.mxu0 0.0
        %317 = vmatprep.subr.mxu0 0.0
        %318 = vmatpush2.msra.mxu0 0.0
        %319 = vmatprep.subr.mxu0 0.0
        %320 = vmatpush2.msra.mxu0 0.0
        %321 = vmatprep.subr.mxu0 0.0
        %322 = vmatpush2.msra.mxu0 0.0
        %323 = vmatprep.subr.mxu0 0.0
        %324 = vmatpush2.msra.mxu0 0.0
        %325 = vmatprep.subr.mxu0 0.0
        %326 = vmatpush2.msra.mxu0 0.0
        %327 = vmatprep.subr.mxu0 0.0
        %328 = vmatpush2.msra.mxu0 0.0
        %329 = vmatprep.subr.mxu0 0.0
        %330 = vmatpush2.msra.mxu0 0.0
        %331 = vmatprep.subr.mxu0 0.0
        %332 = vmatpush2.msra.mxu0 0.0
        %333 = vmatprep.subr.mxu0 0.0
        %334 = vmatpush2.msra.mxu0 0.0
        %335 = vmatprep.subr.mxu0 0.0
        %336 = vmatpush2.msra.mxu0 0.0
        %337 = vmatprep.mubr.f32.mxu0 0.0
        %338 = vmatmul.mubr.f32.gmra.mxu0 %v268
        %v339 = vpop.f32.mrf.mxu0
        %v340 = vadd.f32 %v272, %v339
        %v341 = vpop.f32.mrf.mxu0
        %342 = vdwg.mxu0
        %v343 = vtanh.pop %v340
        %v344 = vlaneseq
        %v345 = vshrl.u32 %v344, 7
        %v346 = vsub.s32 2, %v345
        %v347 = vrot.slane %v189, %v346
        %348 = vmatprep.subr.mxu0 0.0
        %349 = vmatpush1.msra.mxu0 %v188
        %350 = vmatprep.subr.mxu0 0.0
        %351 = vmatpush1.msra.mxu0 %v187
        %352 = vmatprep.subr.mxu0 0.0
        %353 = vmatpush1.msra.mxu0 %v186
        %354 = vmatprep.subr.mxu0 0.0
        %355 = vmatpush1.msra.mxu0 %v185
        %356 = vmatprep.subr.mxu0 0.0
        %357 = vmatpush1.msra.mxu0 %v184
        %358 = vmatprep.subr.mxu0 0.0
        %359 = vmatpush1.msra.mxu0 %v183
        %360 = vmatprep.subr.mxu0 0.0
        %361 = vmatpush1.msra.mxu0 %v182
        %362 = vmatprep.subr.mxu0 0.0
        %363 = vmatpush1.msra.mxu0 %v181
        %364 = vmatprep.subr.mxu0 0.0
        %365 = vmatpush1.msra.mxu0 %v180
        %366 = vmatprep.subr.mxu0 0.0
        %367 = vmatpush1.msra.mxu0 %v179
        %368 = vmatprep.subr.mxu0 0.0
        %369 = vmatpush1.msra.mxu0 %v178
        %370 = vmatprep.subr.mxu0 0.0
        %371 = vmatpush1.msra.mxu0 %v177
        %372 = vmatprep.subr.mxu0 0.0
        %373 = vmatpush1.msra.mxu0 %v176
        %374 = vmatprep.subr.mxu0 0.0
        %375 = vmatpush1.msra.mxu0 %v175
        %376 = vmatprep.subr.mxu0 0.0
        %377 = vmatpush1.msra.mxu0 %v174
        %378 = vmatprep.subr.mxu0 0.0
        %379 = vmatpush1.msra.mxu0 %v173
        %380 = vmatprep.subr.mxu0 0.0
        %381 = vmatpush2.msra.mxu0 0.0
        %382 = vmatprep.subr.mxu0 0.0
        %383 = vmatpush2.msra.mxu0 0.0
        %384 = vmatprep.subr.mxu0 0.0
        %385 = vmatpush2.msra.mxu0 0.0
        %386 = vmatprep.subr.mxu0 0.0
        %387 = vmatpush2.msra.mxu0 0.0
        %388 = vmatprep.subr.mxu0 0.0
        %389 = vmatpush2.msra.mxu0 0.0
        %390 = vmatprep.subr.mxu0 0.0
        %391 = vmatpush2.msra.mxu0 0.0
        %392 = vmatprep.subr.mxu0 0.0
        %393 = vmatpush2.msra.mxu0 0.0
        %394 = vmatprep.subr.mxu0 0.0
        %395 = vmatpush2.msra.mxu0 0.0
        %396 = vmatprep.subr.mxu0 0.0
        %397 = vmatpush2.msra.mxu0 0.0
        %398 = vmatprep.subr.mxu0 0.0
        %399 = vmatpush2.msra.mxu0 0.0
        %400 = vmatprep.subr.mxu0 0.0
        %401 = vmatpush2.msra.mxu0 0.0
        %402 = vmatprep.subr.mxu0 0.0
        %403 = vmatpush2.msra.mxu0 0.0
        %404 = vmatprep.subr.mxu0 0.0
        %405 = vmatpush2.msra.mxu0 0.0
        %406 = vmatprep.subr.mxu0 0.0
        %407 = vmatpush2.msra.mxu0 0.0
        %408 = vmatprep.subr.mxu0 0.0
        %409 = vmatpush2.msra.mxu0 0.0
        %410 = vmatprep.subr.mxu0 0.0
        %411 = vmatpush2.msra.mxu0 0.0
        %412 = vmatprep.mubr.f32.mxu0 0.0
        %413 = vmatmul.mubr.f32.gmra.mxu0 %v343
        %v414 = vpop.f32.mrf.mxu0
        %v415 = vadd.f32 %v347, %v414
        %v416 = vpop.f32.mrf.mxu0
        %417 = vdwg.mxu0
        %418 = vst [vmem:[%s149] sm:$0xff] %v415
        %s419 = sand.u32 %s72, 1
        %s420 = scalar_lea.sflag [#allocation4], %s419
        %s421 = sand.u32 %s72, 1
        %s422 = smul.addr %s421, 8
        %s423 = scalar_lea.vmem [#allocation5], %s422
        // Predicated region
        $region33: #{tpu_custom_call.1} parent=27 // pred_check
          %p424 = pneg %p82
        $region34: #{tpu_custom_call.1} parent=27 // pred_check_branch
          %426 = sbr.rel (%p424) target = $region36
        $region35: #{tpu_custom_call.1} parent=27 // pred_region
          %s428 = ssub.s32 128, 128
          %429 = vsyncadd %s420, %s428
          %s430 = smul.addr %s17, 128
          %s431 = scalar_lea.hbm %s2, %s430
          %s433 = sshll.u32 %s423, 4
          %s434 = int_to_ptr.vmem [resolvable:$true] %s433
          %436 = dma.vmem_to_hbm [thread:$0]  %s434, 128, %s431, %s420
        $region36: #{tpu_custom_call.1} parent=27 // pred_fallthru
          _
      $region28: #{tpu_custom_call.1} parent=5 // pred_fallthru
        _
      %p437 = scmp.le.s32.totalorder 2, %s12
      // Predicated region
      $region37: #{tpu_custom_call.1} parent=5 // pred_check
        %p438 = pneg %p437
      $region38: #{tpu_custom_call.1} parent=5 // pred_check_branch
        %440 = sbr.rel (%p438) target = $region40
      $region39: #{tpu_custom_call.1} parent=5 // pred_region
        %s441 = ssub.s32 %s12, 2
        // Predicated region
        $region41: #{tpu_custom_call.1} parent=39 // pred_check
          %p442 = pneg %p88
        $region42: #{tpu_custom_call.1} parent=39 // pred_check_branch
          %444 = sbr.rel (%p442) target = $region44
        $region43: #{tpu_custom_call.1} parent=39 // pred_region
          %s445 = sand.u32 %s73, 1
          %s446 = scalar_lea.sflag [#allocation4], %s445
          %s447 = sand.u32 %s73, 1
          %s448 = smul.addr %s447, 8
          %s449 = scalar_lea.vmem [#allocation5], %s448
          %450 = dma.done %s446, 128
        $region44: #{tpu_custom_call.1} parent=39 // pred_fallthru
          _
      $region40: #{tpu_custom_call.1} parent=5 // pred_fallthru
        _
    $region6: #{tpu_custom_call.1} parent=1 // loop_footer
      %s16 = sadd.s32 1, %s12
    $region7: #{tpu_custom_call.1} parent=1 // loop_footer_branch
      %11 = sbr.rel target = $region3
    $region8: #{tpu_custom_call.1} parent=1 // loop_exit
      _
    %451 = vsyncpa [#allocation3], 1
    %s452 = scalar_lea.sflag [#allocation3], 1
    %453 = vsyncpa %s452, 1
    %454 = vsyncpa [#allocation4], 1
    %s455 = scalar_lea.sflag [#allocation4], 1
    %456 = vsyncpa %s455, 1

</llo_original>
